<compile_context>
chip_gen: v7x
topology: tpu7x:2x2x1
jax: 0.10.0
libtpu: 0.0.40
codegen_flags: <defaults>
</compile_context>

<pallas_src>
import jax
import jax.numpy as jnp
from jax.experimental import pallas as pl
from jax.experimental.pallas import tpu as pltpu

CLS_TOKEN_POSITION = 0


def _cls_copy_kernel(x_ref, o_ref):
    # x_ref: (TB, H) VMEM tile containing only the CLS-token rows of this batch
    #        block (the gather is done by the BlockSpec index_map, so nothing
    #        else is ever DMA'd from HBM).
    # o_ref: (TB, H) output tile. Pure copy.
    o_ref[...] = x_ref[...]


def cls_pooler(last_hidden_state, attention_mask=None, pooler_output=None,
               use_pooler_output=True, cls_token_position=CLS_TOKEN_POSITION,
               block_b=1024):
    """Pallas implementation of ClsPooler.forward.

    Args:
      last_hidden_state: [B, S, H] array.
      attention_mask:    [B, S] array (accepted for signature parity; ClsPooler
                         ignores it, matching the PyTorch module).
      pooler_output:     optional [B, H] array (passthrough branch).
      use_pooler_output: mirrors the module flag.
      cls_token_position: sequence position of the CLS token (module hardcodes 0).
      block_b:           batch rows per grid step (only matters for large B).

    Returns:
      [B, H] array.
    """
    if use_pooler_output and pooler_output is not None:
        # Passthrough branch — identical semantics to returning x.pooler_output.
        return pooler_output

    B, S, H = last_hidden_state.shape
    # Row-major [B, S, H] -> [B, S*H] is a free (bitcast-style) reshape; the CLS
    # token of batch b occupies elements [cls*H : (cls+1)*H) of row b, i.e.
    # exactly block index `cls_token_position` when the lane-block size is H.
    x2d = last_hidden_state.reshape(B, S * H)

    tb = min(B, block_b)
    grid = (pl.cdiv(B, tb),)

    return pl.pallas_call(
        _cls_copy_kernel,
        out_shape=jax.ShapeDtypeStruct((B, H), last_hidden_state.dtype),
        grid=grid,
        in_specs=[
            # Fetch only the CLS rows: (tb, H) slab at block (i, cls_token_position).
            pl.BlockSpec((tb, H), lambda i: (i, cls_token_position)),
        ],
        out_specs=pl.BlockSpec((tb, H), lambda i: (i, 0)),
        compiler_params=pltpu.CompilerParams(
            dimension_semantics=("parallel",)),
    )(x2d)


if __name__ == "__main__":
    key = jax.random.PRNGKey(0)
    k1, k2 = jax.random.split(key)

    # Small, tile-friendly demo shape: B=8 (full sublane), H=128 (lane-dense).
    B, S, H = 8, 8, 128
    last_hidden_state = jax.random.normal(k1, (B, S, H), dtype=jnp.float32)
    attention_mask = jnp.ones((B, S), dtype=jnp.int32)

    # Branch 2: no pooler_output → kernel copies only the CLS rows.
    out = cls_pooler(last_hidden_state, attention_mask,
                     pooler_output=None, use_pooler_output=True)
    out = jax.block_until_ready(out)

    ref = last_hidden_state[:, CLS_TOKEN_POSITION, :]
    assert out.shape == (B, H), out.shape
    assert jnp.allclose(out, ref), "mismatch with reference CLS slice"

    # Branch 1: pooler_output provided → passthrough.
    pooled = jax.random.normal(k2, (B, H), dtype=jnp.float32)
    out2 = cls_pooler(last_hidden_state, attention_mask,
                      pooler_output=pooled, use_pooler_output=True)
    out2 = jax.block_until_ready(out2)
    assert jnp.allclose(out2, pooled)

    print("KERNEL_OK")
</pallas_src>

<mosaic_0001>
module attributes {stable_mosaic.version = 11 : i64} {
  func.func @_cls_copy_kernel(%arg0: i32, %arg1: memref<8x128xf32, #tpu.memory_space<vmem>>, %arg2: memref<8x128xf32, #tpu.memory_space<vmem>>) attributes {dimension_semantics = [#tpu.dimension_semantics<parallel>], iteration_bounds = array<i64: 1>, scalar_prefetch = 0 : i64, scratch_operands = 0 : i64, tpu.core_type = #tpu.core_type<tc>, window_params = [{transform_indices = @transform_0, window_bounds = array<i64: 8, 128>}, {transform_indices = @transform_1, window_bounds = array<i64: 8, 128>}]} {
    %c0 = arith.constant 0 : index
    %c0_0 = arith.constant 0 : index
    %0 = vector.load %arg1[%c0, %c0_0] : memref<8x128xf32, #tpu.memory_space<vmem>>, vector<8x128xf32>
    %c0_1 = arith.constant 0 : index
    %c0_2 = arith.constant 0 : index
    %1 = vector.load %arg2[%c0_1, %c0_2] : memref<8x128xf32, #tpu.memory_space<vmem>>, vector<8x128xf32>
    tpu.vector_store %arg2[%c0_1, %c0_2], %0 {strides = array<i32>} : memref<8x128xf32, #tpu.memory_space<vmem>>, vector<8x128xf32>,
    return
  }
  func.func @transform_0(%arg0: i32) -> (i32, i32) {
    %c0_i32 = arith.constant 0 : i32
    %c0_i32_0 = arith.constant 0 : i32
    return %arg0, %c0_i32 : i32, i32
  }
  func.func @transform_1(%arg0: i32) -> (i32, i32) {
    %c0_i32 = arith.constant 0 : i32
    %c0_i32_0 = arith.constant 0 : i32
    return %arg0, %c0_i32 : i32, i32
  }
}

</mosaic_0001>

<llo_original>
// kernel: tpu_custom_call.1
$region0: #{tpu_custom_call.1}
  #allocation0 [shape = 'u32[]', space=smem, size = 0x4, offset = 0x4, fixed_abs, tag = 'smem constant byte address 0x4 - core index']
  #allocation1 [shape = 'u32[144,128]{1,0:T(1,128)}', space=vmem, size = 0x12000, scoped, tag = 'internal scratch']
  %s0 = inlined_call_operand.hbm [shape: f32[8,1024], index: 0, kind: input, shape index: {}]
  %s1 = inlined_call_operand.hbm [shape: f32[8,128], index: 1, kind: output, shape index: {}]
  %s2 = sld [smem:[#allocation0]]
  $region18: #{tpu_custom_call.1} parent=0
    _
  %s4 = ssub.s32 1, %s2
  %s5 = scalar_select 0, %s4, %s2
  $region1: #{tpu_custom_call.1} parent=0
    #allocation2 [shape = 'u8[4096]{0}', space=vmem, size = 0x1000, scoped, tag = 'input window, operand 0, single buffered']
    #allocation3 [shape = 's32[1]{0}', space=sflag, size = 0x4, scoped, tag = 'scoped memory for tpu_custom_call.1']
    #allocation4 [shape = 's32[1]{0}', space=sflag, size = 0x4, scoped, tag = 'scoped memory for tpu_custom_call.1']
    #allocation5 [shape = 'u8[4096]{0}', space=vmem, size = 0x1000, scoped, tag = 'output window, operand 0, single buffered']
    %6 = vsyncpa [#allocation3], 0
    %7 = vsyncpa [#allocation4], 0
    // Predicated region
    $region2: #{tpu_custom_call.1} parent=1 // pred_check
      _
    $region3: #{tpu_custom_call.1} parent=1 // pred_check_branch
      %9 = sbr.rel (0) target = $region5
    $region4: #{tpu_custom_call.1} parent=1 // pred_region
      %s11 = ssub.s32 128, 128
      %12 = vsyncadd [#allocation3], %s11
      %s14 = sshll.u32 [#allocation2], 4
      %s15 = int_to_ptr.vmem [resolvable:$true] %s14
      %17 = dma.hbm_to_vmem [thread:$0]  %s0, 128, %s15, [#allocation3]
    $region5: #{tpu_custom_call.1} parent=1 // pred_fallthru
      _
    // Predicated region
    $region6: #{tpu_custom_call.1} parent=1 // pred_check
      _
    $region7: #{tpu_custom_call.1} parent=1 // pred_check_branch
      %19 = sbr.rel (0) target = $region9
    $region8: #{tpu_custom_call.1} parent=1 // pred_region
      %20 = dma.done [#allocation3], 128
    $region9: #{tpu_custom_call.1} parent=1 // pred_fallthru
      _
    %v21 = vld [vmem:[#allocation2] sm:$0xff]
    %22 = vst [vmem:[#allocation5] sm:$0xff] %v21
    // Predicated region
    $region10: #{tpu_custom_call.1} parent=1 // pred_check
      _
    $region11: #{tpu_custom_call.1} parent=1 // pred_check_branch
      %24 = sbr.rel (0) target = $region13
    $region12: #{tpu_custom_call.1} parent=1 // pred_region
      %s26 = ssub.s32 128, 128
      %27 = vsyncadd [#allocation4], %s26
      %s29 = sshll.u32 [#allocation5], 4
      %s30 = int_to_ptr.vmem [resolvable:$true] %s29
      %32 = dma.vmem_to_hbm [thread:$0]  %s30, 128, %s1, [#allocation4]
    $region13: #{tpu_custom_call.1} parent=1 // pred_fallthru
      _
    // Predicated region
    $region14: #{tpu_custom_call.1} parent=1 // pred_check
      _
    $region15: #{tpu_custom_call.1} parent=1 // pred_check_branch
      %34 = sbr.rel (0) target = $region17
    $region16: #{tpu_custom_call.1} parent=1 // pred_region
      %35 = dma.done [#allocation4], 128
    $region17: #{tpu_custom_call.1} parent=1 // pred_fallthru
      _
    %36 = vsyncpa [#allocation3], 1
    %37 = vsyncpa [#allocation4], 1

</llo_original>
